<compile_context>
chip_gen: v7x
topology: tpu7x:2x2x1
jax: 0.10.0
libtpu: 0.0.40
codegen_flags: <defaults>
</compile_context>

<pallas_src>
import functools

import jax
import jax.numpy as jnp
from jax.experimental import pallas as pl
from jax.experimental.pallas import tpu as pltpu

_MIB = 1024 * 1024


def _round_up(x, m):
    return (x + m - 1) // m * m


def _vmem_budget_bytes():
    """Generation-aware VMEM budget (v5e/v6e: 128 MiB, v7x: 64 MiB physical)."""
    try:
        cap = int(pltpu.get_tpu_info().vmem_capacity_bytes)
    except Exception:
        cap = 64 * _MIB  # unknown -> assume the smallest (v7x-sized) VMEM
    # Leave headroom for compiler scratch / un-accounted temporaries.
    return max(32 * _MIB, cap - 24 * _MIB)


def _auto_class_tile(H, C, tm, act_bytes, budget):
    """Largest class tile (multiple of 128, or full C) fitting the VMEM budget.

    Per-core accounting (bytes):
      activations      2 * tm * H * act_bytes   (double-buffered stream)
      targets          2 * tm * 128 * 4         ((tm, 1) int32, lane-padded)
      weight           2 * H * tc * 2           (bf16; budgeted double-buffered
                                                 even though we request Buffered(1))
      out accumulator  2 * 8 * tc * 4
      logits + select  ~2 * tm * tc * 4         (un-specced f32 intermediates)
    """
    fixed = 2 * tm * H * act_bytes + 2 * tm * 128 * 4 + 2 * _MIB  # + headroom
    per_col = 2 * H * 2 + 2 * 8 * 4 + 2 * tm * 4
    if fixed + per_col * C <= budget:
        return C  # full weight resident, no class tiling needed
    return max(128, (budget - fixed) // per_col // 128 * 128)


def _target_energy_kernel(s_ref, w_ref, t_ref, o_ref, *, rows, tm, tc,
                          n_rt_per_split, compute_dtype):
    sp = pl.program_id(0)   # row-half (megacore split)
    j = pl.program_id(1)    # class tile
    i = pl.program_id(2)    # row tile within this split (reduction axis)

    # (tm, H) @ (H, tc) on the MXU with f32 accumulation.  The activation cast
    # happens here (per tile) instead of as a separate wrapper-side XLA pass
    # over the whole stream.
    act = s_ref[...].astype(compute_dtype)
    logits = jnp.dot(act, w_ref[...], preferred_element_type=jnp.float32)
    logits = jnp.clip(logits, -30.0, 30.0)                       # clamp(-30, 30)

    # Row validity handles both the ragged last tile and the clamped overhang
    # tiles of the second row-half: invalid rows get target -1, which never
    # matches any class id, so they contribute exactly 0 (even if the padded
    # block data is garbage/NaN - jnp.where never selects it).
    start = (sp * n_rt_per_split + i) * tm
    row_id = start + jax.lax.broadcasted_iota(jnp.int32, (tm, 1), 0)
    local_tgt = t_ref[...] - j * tc                              # id within tile
    local_tgt = jnp.where(row_id < rows, local_tgt, -1)

    # One-hot gather along the class axis (pure VPU select; out-of-tile or
    # out-of-range targets simply never match).
    col = jax.lax.broadcasted_iota(jnp.int32, (tm, tc), 1)
    sel = jnp.where(col == local_tgt, logits, jnp.float32(0.0))  # (tm, tc)

    # Fold tm rows into 8 sublanes; letting Mosaic lane-chunk the reduction
    # keeps the live accumulator at (8, tc) (no hand-unrolled vreg blowup).
    tile_sum = jnp.sum(sel.reshape(tm // 8, 8, tc), axis=0)      # (8, tc) f32

    # VMEM-resident accumulator: init on the first row tile of this
    # (row-half, class-tile) pass; Pallas writes the block to HBM once, when
    # the (sp, j) output block index changes.
    @pl.when(i == 0)
    def _():
        o_ref[...] = jnp.zeros_like(o_ref)

    o_ref[...] += tile_sum


def target_energy(sample, weight, target, *, tm=512, class_tile=None,
                  compute_dtype=jnp.bfloat16):
    """Compute -sum_{b,t} clip(sample @ weight, -30, 30)[b, t, target[b, t]].

    sample: (B, T, H); weight: (H, C); target: (B, T) int. Returns f32 scalar.
    """
    B, T, H = sample.shape
    H2, C = weight.shape
    assert H == H2

    rows = B * T
    s2 = sample.reshape(rows, H)                   # activation stream, dtype kept
    t2 = target.reshape(rows, 1).astype(jnp.int32)
    # TODO(synk): a lane-dense (num_tiles, tm) target layout would avoid the
    # 128-lane HBM padding of (rows, 1), but needs an in-kernel lane->sublane
    # transpose of the (1, tm) tile; keeping the simple (tm, 1) stream for now.
    w = weight.astype(compute_dtype)               # one-off small cast

    # Row tiling / megacore split over row halves.
    tm = max(8, min(_round_up(tm, 8), _round_up(rows, 8)))
    n_rt_total = pl.cdiv(rows, tm)
    n_split = 2 if n_rt_total >= 2 else 1          # keep both v7x TCs busy
    n_rt_per_split = pl.cdiv(n_rt_total, n_split)

    # Class tiling sized from the per-generation VMEM budget.
    budget = _vmem_budget_bytes()
    act_bytes = jnp.dtype(s2.dtype).itemsize
    if class_tile is None:
        tc = _auto_class_tile(H, C, tm, act_bytes, budget)
    else:
        tc = max(128, _round_up(min(class_tile, C), 128))
    if tc >= C:
        tc = C
    n_ctiles = pl.cdiv(C, tc)

    # Overhang row tiles (odd tile count split in two) are clamped onto the
    # last real tile; the in-kernel row mask zeroes their contribution.
    def row_block(sp, i):
        return jnp.minimum(sp * n_rt_per_split + i, n_rt_total - 1)

    act_spec = pl.BlockSpec((tm, H), lambda sp, j, i: (row_block(sp, i), 0))
    tgt_spec = pl.BlockSpec((tm, 1), lambda sp, j, i: (row_block(sp, i), 0))
    # The weight block only changes when the class tile changes -> single
    # buffer it so residency costs 1x (not 2x) H * tc * 2 bytes.
    try:
        w_spec = pl.BlockSpec((H, tc), lambda sp, j, i: (0, j),
                              pipeline_mode=pl.Buffered(1))
    except TypeError:  # pipeline_mode unavailable -> default double buffering
        w_spec = pl.BlockSpec((H, tc), lambda sp, j, i: (0, j))
    out_spec = pl.BlockSpec((8, tc), lambda sp, j, i: (sp, j))

    kernel = functools.partial(
        _target_energy_kernel, rows=rows, tm=tm, tc=tc,
        n_rt_per_split=n_rt_per_split, compute_dtype=compute_dtype)

    partials = pl.pallas_call(
        kernel,
        out_shape=jax.ShapeDtypeStruct((n_split * 8, n_ctiles * tc), jnp.float32),
        grid_spec=pltpu.PrefetchScalarGridSpec(
            num_scalar_prefetch=0,
            grid=(n_split, n_ctiles, n_rt_per_split),
            in_specs=[act_spec, w_spec, tgt_spec],
            out_specs=out_spec,
        ),
        compiler_params=pltpu.CompilerParams(
            # Row-half / class-tile axes produce independent output blocks
            # ("parallel" -> v7x megacore split); the row-tile axis is the
            # reduction and stays innermost ("arbitrary").
            dimension_semantics=("parallel", "parallel", "arbitrary"),
            vmem_limit_bytes=int(budget),
        ),
    )(s2, w, t2)

    # Single tiny cross-lane reduce + negate in the epilogue; class/row
    # padding entries are exactly zero so they do not affect the sum.
    return -jnp.sum(partials)


def _reference_bf16(sample, weight, target):
    """Matched-precision reference (bf16 MXU inputs, f32 accumulation)."""
    H = sample.shape[-1]
    logits = jnp.dot(sample.reshape(-1, H).astype(jnp.bfloat16),
                     weight.astype(jnp.bfloat16),
                     preferred_element_type=jnp.float32)
    x = jnp.clip(logits, -30.0, 30.0)
    return -jnp.sum(jnp.take_along_axis(x, target.reshape(-1, 1), axis=1))


if __name__ == "__main__":
    key = jax.random.PRNGKey(0)
    k_s, k_w, k_t = jax.random.split(key, 3)

    # Primary small case consistent with the module: B=2, T=8, H=32, C=128.
    B, T, H, C = 2, 8, 32, 128
    sample = jax.random.normal(k_s, (B, T, H), dtype=jnp.float32)
    weight = jax.random.normal(k_w, (H, C), dtype=jnp.float32) * 0.5
    target = jax.random.randint(k_t, (B, T), 0, C, dtype=jnp.int32)

    energy = jax.block_until_ready(target_energy(sample, weight, target))

    ref_bf = _reference_bf16(sample, weight, target)
    x32 = jnp.clip(sample @ weight, -30.0, 30.0)
    ref32 = -jnp.sum(jnp.take_along_axis(x32, target[..., None], axis=2))
    assert jnp.allclose(energy, ref_bf, rtol=1e-4, atol=1e-2), (energy, ref_bf)
    assert jnp.allclose(energy, ref32, rtol=2e-2, atol=5e-1), (energy, ref32)

    # Exercise the multi-tile / row-half split / ragged-row path (rows=21).
    sample2 = jax.random.normal(jax.random.PRNGKey(1), (3, 7, H), dtype=jnp.float32)
    target2 = jax.random.randint(jax.random.PRNGKey(2), (3, 7), 0, C, dtype=jnp.int32)
    e2 = jax.block_until_ready(target_energy(sample2, weight, target2, tm=8))
    r2 = _reference_bf16(sample2, weight, target2)
    assert jnp.allclose(e2, r2, rtol=1e-4, atol=1e-2), (e2, r2)

    # Exercise the class-tiling path (C=320 -> three 128-wide class tiles).
    C3 = 320
    weight3 = jax.random.normal(jax.random.PRNGKey(3), (H, C3), dtype=jnp.float32) * 0.5
    target3 = jax.random.randint(jax.random.PRNGKey(4), (B, T), 0, C3, dtype=jnp.int32)
    e3 = jax.block_until_ready(
        target_energy(sample, weight3, target3, tm=8, class_tile=128))
    r3 = _reference_bf16(sample, weight3, target3)
    assert jnp.allclose(e3, r3, rtol=1e-4, atol=1e-2), (e3, r3)

    print("KERNEL_OK")
</pallas_src>

<mosaic_0001>
module attributes {stable_mosaic.version = 11 : i64} {
  func.func @_target_energy_kernel(%arg0: i32, %arg1: i32, %arg2: i32, %arg3: memref<16x32xf32, #tpu.memory_space<vmem>>, %arg4: memref<32x128xbf16, #tpu.memory_space<vmem>>, %arg5: memref<16x1xi32, #tpu.memory_space<vmem>>, %arg6: memref<8x128xf32, #tpu.memory_space<vmem>>) attributes {dimension_semantics = [#tpu.dimension_semantics<parallel>, #tpu.dimension_semantics<parallel>, #tpu.dimension_semantics<arbitrary>], iteration_bounds = array<i64: 1, 1, 1>, scalar_prefetch = 0 : i64, scratch_operands = 0 : i64, tpu.core_type = #tpu.core_type<tc>, window_params = [{transform_indices = @transform_0, window_bounds = array<i64: 16, 32>}, {pipeline_mode = #tpu.pipeline_mode<synchronous>, transform_indices = @transform_1, window_bounds = array<i64: 32, 128>}, {transform_indices = @transform_2, window_bounds = array<i64: 16, 1>}, {transform_indices = @transform_3, window_bounds = array<i64: 8, 128>}]} {
    %c0 = arith.constant 0 : index
    %c0_0 = arith.constant 0 : index
    %0 = vector.load %arg3[%c0, %c0_0] : memref<16x32xf32, #tpu.memory_space<vmem>>, vector<16x32xf32>
    %1 = arith.truncf %0 : vector<16x32xf32> to vector<16x32xbf16>
    %c0_1 = arith.constant 0 : index
    %c0_2 = arith.constant 0 : index
    %2 = vector.load %arg4[%c0_1, %c0_2] : memref<32x128xbf16, #tpu.memory_space<vmem>>, vector<32x128xbf16>
    %cst = arith.constant dense<0.000000e+00> : vector<16x128xf32>
    %3 = tpu.matmul %1, %2, %cst {dimension_numbers = #tpu.dot_dimension_numbers<[1], [0], [0], [1], [0, 0, 1, 1], [], []>} : vector<16x32xbf16>, vector<32x128xbf16>, vector<16x128xf32> -> vector<16x128xf32>
    %cst_3 = arith.constant -3.000000e+01 : f32
    %cst_4 = arith.constant 3.000000e+01 : f32
    %4 = vector.broadcast %cst_3 : f32 to vector<16x128xf32>
    %5 = arith.maximumf %4, %3 : vector<16x128xf32>
    %6 = vector.broadcast %cst_4 : f32 to vector<16x128xf32>
    %7 = arith.minimumf %6, %5 : vector<16x128xf32>
    %c1_i32 = arith.constant 1 : i32
    %8 = arith.muli %arg0, %c1_i32 : i32
    %9 = arith.addi %8, %arg2 : i32
    %c16_i32 = arith.constant 16 : i32
    %10 = arith.muli %9, %c16_i32 : i32
    %11 = tpu.iota {dimensions = array<i32: 0>} : vector<16x1xi32>
    %12 = vector.broadcast %10 : i32 to vector<16x1xi32>
    %13 = arith.addi %12, %11 : vector<16x1xi32>
    %c0_5 = arith.constant 0 : index
    %c0_6 = arith.constant 0 : index
    %14 = vector.load %arg5[%c0_5, %c0_6] : memref<16x1xi32, #tpu.memory_space<vmem>>, vector<16x1xi32>
    %c128_i32 = arith.constant 128 : i32
    %15 = arith.muli %arg1, %c128_i32 : i32
    %16 = vector.broadcast %15 : i32 to vector<16x1xi32>
    %17 = arith.subi %14, %16 : vector<16x1xi32>
    %c16_i32_7 = arith.constant 16 : i32
    %18 = vector.broadcast %c16_i32_7 : i32 to vector<16x1xi32>
    %19 = arith.cmpi slt, %13, %18 : vector<16x1xi32>
    %c-1_i32 = arith.constant -1 : i32
    %20 = vector.broadcast %c-1_i32 : i32 to vector<16x1xi32>
    %21 = arith.select %19, %17, %20 : vector<16x1xi1>, vector<16x1xi32>
    %22 = tpu.iota {dimensions = array<i32: 1>} : vector<16x128xi32>
    %23 = vector.broadcast %21 : vector<16x1xi32> to vector<16x128xi32>
    %24 = arith.cmpi eq, %22, %23 : vector<16x128xi32>
    %cst_8 = arith.constant 0.000000e+00 : f32
    %25 = vector.broadcast %cst_8 : f32 to vector<16x128xf32>
    %26 = arith.select %24, %7, %25 : vector<16x128xi1>, vector<16x128xf32>
    %27 = vector.shape_cast %26 : vector<16x128xf32> to vector<2x8x128xf32>
    %cst_9 = arith.constant dense<0.000000e+00> : vector<8x128xf32>
    %28 = vector.multi_reduction <add>, %27, %cst_9 [0] : vector<2x8x128xf32> to vector<8x128xf32>
    %c0_i32 = arith.constant 0 : i32
    %29 = arith.cmpi eq, %arg2, %c0_i32 : i32
    %30 = arith.extui %29 : i1 to i32
    %c0_i32_10 = arith.constant 0 : i32
    %31 = arith.cmpi ne, %30, %c0_i32_10 : i32
    scf.if %31 {
      %cst_15 = arith.constant 0.000000e+00 : f32
      %35 = vector.broadcast %cst_15 : f32 to vector<8x128xf32>
      %c0_16 = arith.constant 0 : index
      %c0_17 = arith.constant 0 : index
      %36 = vector.load %arg6[%c0_16, %c0_17] : memref<8x128xf32, #tpu.memory_space<vmem>>, vector<8x128xf32>
      tpu.vector_store %arg6[%c0_16, %c0_17], %35 {strides = array<i32>} : memref<8x128xf32, #tpu.memory_space<vmem>>, vector<8x128xf32>,
    } else {
    }
    %c0_11 = arith.constant 0 : index
    %c0_12 = arith.constant 0 : index
    %32 = vector.load %arg6[%c0_11, %c0_12] : memref<8x128xf32, #tpu.memory_space<vmem>>, vector<8x128xf32>
    %33 = arith.addf %32, %28 : vector<8x128xf32>
    %c0_13 = arith.constant 0 : index
    %c0_14 = arith.constant 0 : index
    %34 = vector.load %arg6[%c0_13, %c0_14] : memref<8x128xf32, #tpu.memory_space<vmem>>, vector<8x128xf32>
    tpu.vector_store %arg6[%c0_13, %c0_14], %33 {strides = array<i32>} : memref<8x128xf32, #tpu.memory_space<vmem>>, vector<8x128xf32>,
    return
  }
  func.func @transform_0(%arg0: i32, %arg1: i32, %arg2: i32) -> (i32, i32) {
    %c1_i32 = arith.constant 1 : i32
    %0 = arith.muli %arg0, %c1_i32 : i32
    %1 = arith.addi %0, %arg2 : i32
    %c0_i32 = arith.constant 0 : i32
    %2 = arith.minsi %1, %c0_i32 : i32
    %c0_i32_0 = arith.constant 0 : i32
    %c0_i32_1 = arith.constant 0 : i32
    return %2, %c0_i32_0 : i32, i32
  }
  func.func @transform_1(%arg0: i32, %arg1: i32, %arg2: i32) -> (i32, i32) {
    %c0_i32 = arith.constant 0 : i32
    %c0_i32_0 = arith.constant 0 : i32
    return %c0_i32, %arg1 : i32, i32
  }
  func.func @transform_2(%arg0: i32, %arg1: i32, %arg2: i32) -> (i32, i32) {
    %c1_i32 = arith.constant 1 : i32
    %0 = arith.muli %arg0, %c1_i32 : i32
    %1 = arith.addi %0, %arg2 : i32
    %c0_i32 = arith.constant 0 : i32
    %2 = arith.minsi %1, %c0_i32 : i32
    %c0_i32_0 = arith.constant 0 : i32
    %c0_i32_1 = arith.constant 0 : i32
    return %2, %c0_i32_0 : i32, i32
  }
  func.func @transform_3(%arg0: i32, %arg1: i32, %arg2: i32) -> (i32, i32) {
    %c0_i32 = arith.constant 0 : i32
    return %arg0, %arg1 : i32, i32
  }
}

</mosaic_0001>

<llo_original>
// kernel: tpu_custom_call.1
$region0: #{tpu_custom_call.1}
  #allocation0 [shape = 'u32[]', space=smem, size = 0x4, offset = 0x4, fixed_abs, tag = 'smem constant byte address 0x4 - core index']
  #allocation1 [shape = 'u32[144,128]{1,0:T(1,128)}', space=vmem, size = 0x12000, scoped, tag = 'internal scratch']
  %s0 = inlined_call_operand.vmem [shape: f32[16,32], index: 0, kind: input, shape index: {}]
  %s1 = inlined_call_operand.hbm [shape: bf16[32,128], index: 1, kind: input, shape index: {}]
  %s2 = inlined_call_operand.vmem [shape: s32[16,1], index: 2, kind: input, shape index: {}]
  %s3 = inlined_call_operand.hbm [shape: f32[8,128], index: 3, kind: output, shape index: {}]
  %s4 = sld [smem:[#allocation0]]
  $region30: #{tpu_custom_call.1} parent=0
    _
  %s6 = ssub.s32 1, %s4
  %s7 = scalar_select 0, %s6, %s4
  $region1: #{tpu_custom_call.1} parent=0
    #allocation2 [shape = 'u8[8192]{0}', space=vmem, size = 0x2000, scoped, tag = 'input window, operand 1, single buffered']
    #allocation3 [shape = 's32[1]{0}', space=sflag, size = 0x4, scoped, tag = 'scoped memory for tpu_custom_call.1']
    #allocation4 [shape = 's32[1]{0}', space=sflag, size = 0x4, scoped, tag = 'scoped memory for tpu_custom_call.1']
    #allocation5 [shape = 'u8[4096]{0}', space=vmem, size = 0x1000, scoped, tag = 'output window, operand 0, single buffered']
    %8 = vsyncpa [#allocation3], 0
    %9 = vsyncpa [#allocation4], 0
    // Predicated region
    $region2: #{tpu_custom_call.1} parent=1 // pred_check
      _
    $region3: #{tpu_custom_call.1} parent=1 // pred_check_branch
      %11 = sbr.rel (0) target = $region5
    $region4: #{tpu_custom_call.1} parent=1 // pred_region
      %s12 = sadd.s32 0, 0
      %p13 = scmp.lt.s32.totalorder %s12, 0
      %s14 = scalar_select %p13, %s12, 0
      %s15 = smul.u32 2, %s14
      %p16 = scmp.lt.s32.totalorder %s15, 1
      %s17 = scalar_select %p16, %s15, 1
      %s18 = smul.addr %s17, 8
      %s19 = scalar_lea.vmem %s0, %s18
      %s20 = sadd.s32 0, 0
      %p21 = scmp.lt.s32.totalorder %s20, 0
      %s22 = scalar_select %p21, %s20, 0
      %s23 = smul.u32 2, %s22
    $region5: #{tpu_custom_call.1} parent=1 // pred_fallthru
      _
    // Predicated region
    $region6: #{tpu_custom_call.1} parent=1 // pred_check
      _
    $region7: #{tpu_custom_call.1} parent=1 // pred_check_branch
      %25 = sbr.rel (0) target = $region9
    $region8: #{tpu_custom_call.1} parent=1 // pred_region
      %s27 = ssub.s32 256, 256
      %28 = vsyncadd [#allocation3], %s27
      %s29 = sshll.u32 [#allocation2], 4
      %s30 = int_to_ptr.vmem [resolvable:$true] %s29
      %35 = dma.hbm_to_vmem [thread:$0]  %s1, 256, %s30, [#allocation3], 64, 64, 4
    $region9: #{tpu_custom_call.1} parent=1 // pred_fallthru
      _
    // Predicated region
    $region10: #{tpu_custom_call.1} parent=1 // pred_check
      _
    $region11: #{tpu_custom_call.1} parent=1 // pred_check_branch
      %37 = sbr.rel (0) target = $region13
    $region12: #{tpu_custom_call.1} parent=1 // pred_region
      %s38 = sadd.s32 0, 0
      %p39 = scmp.lt.s32.totalorder %s38, 0
      %s40 = scalar_select %p39, %s38, 0
      %s41 = smul.u32 2, %s40
      %p42 = scmp.lt.s32.totalorder %s41, 1
      %s43 = scalar_select %p42, %s41, 1
      %s44 = smul.addr %s43, 8
      %s45 = scalar_lea.vmem %s2, %s44
      %s46 = sadd.s32 0, 0
      %p47 = scmp.lt.s32.totalorder %s46, 0
      %s48 = scalar_select %p47, %s46, 0
      %s49 = smul.u32 2, %s48
    $region13: #{tpu_custom_call.1} parent=1 // pred_fallthru
      _
    // Predicated region
    $region14: #{tpu_custom_call.1} parent=1 // pred_check
      _
    $region15: #{tpu_custom_call.1} parent=1 // pred_check_branch
      %51 = sbr.rel (0) target = $region17
    $region16: #{tpu_custom_call.1} parent=1 // pred_region
      %52 = dma.done [#allocation3], 256
    $region17: #{tpu_custom_call.1} parent=1 // pred_fallthru
      _
    %s53 = sadd.s32 0, 0
    %p54 = scmp.lt.s32.totalorder %s53, 0
    %s55 = scalar_select %p54, %s53, 0
    %s56 = smul.u32 2, %s55
    %p57 = scmp.lt.s32.totalorder %s56, 1
    %s58 = scalar_select %p57, %s56, 1
    %s59 = smul.addr %s58, 8
    %s60 = scalar_lea.vmem %s0, %s59
    %s61 = sadd.s32 0, 0
    %p62 = scmp.lt.s32.totalorder %s61, 0
    %s63 = scalar_select %p62, %s61, 0
    %s64 = smul.u32 2, %s63
    %p65 = scmp.lt.s32.totalorder %s64, 1
    %s66 = scalar_select %p65, %s64, 1
    %s67 = smul.addr %s66, 8
    %s68 = scalar_lea.vmem %s2, %s67
    %s69 = sadd.s32 0, 0
    %p70 = scmp.lt.s32.totalorder %s69, 0
    %s71 = scalar_select %p70, %s69, 0
    %s72 = smul.u32 2, %s71
    %p73 = scmp.lt.s32.totalorder %s72, 1
    %s74 = scalar_select %p73, %s72, 1
    %s75 = smul.addr %s74, 8
    %s76 = scalar_lea.vmem %s0, %s75
    %s77 = sadd.s32 0, 0
    %p78 = scmp.lt.s32.totalorder %s77, 0
    %s79 = scalar_select %p78, %s77, 0
    %s80 = smul.u32 2, %s79
    %s81 = sadd.s32 0, 0
    %p82 = scmp.lt.s32.totalorder %s81, 0
    %s83 = scalar_select %p82, %s81, 0
    %s84 = smul.u32 2, %s83
    %p85 = scmp.lt.s32.totalorder %s84, 1
    %s86 = scalar_select %p85, %s84, 1
    %s87 = smul.addr %s86, 8
    %s88 = scalar_lea.vmem %s2, %s87
    %s89 = sadd.s32 0, 0
    %p90 = scmp.lt.s32.totalorder %s89, 0
    %s91 = scalar_select %p90, %s89, 0
    %s92 = smul.u32 2, %s91
    %v94 = vld [vmem:[%s76] sm:$0xff]
    %v95 = vld [vmem:[%s76 + $0x8] sm:$0xff]
    %v96 = vpack.c.bf16 %v95, %v94
    %v97 = vld [vmem:[#allocation2] sm:$0xf]
    %v98 = vld [vmem:[#allocation2 + $0x4] sm:$0xf]
    %v99 = vld [vmem:[#allocation2 + $0x8] sm:$0xf]
    %v100 = vld [vmem:[#allocation2 + $0xc] sm:$0xf]
    %v105 = vunpack.c.l.b16 %v97
    %v106 = vunpack.c.l.b16 %v98
    %v107 = vunpack.c.l.b16 %v99
    %v108 = vunpack.c.l.b16 %v100
    %v109 = vpack.c.b16 %v106, %v105
    %v110 = vpack.c.b16 %v108, %v107
    %vm113 = vcmask 261120
    %v115 = vsel %vm113, %v96, 0
    %117 = vmatprep.subr.bf16.mxu0 0
    %118 = vmatpush1.bf16.msra.mxu0 %v109
    %119 = vmatprep.subr.bf16.mxu0 0
    %120 = vmatpush1.bf16.msra.mxu0 %v110
    %121 = vmatprep.subr.bf16.mxu0 0
    %122 = vmatpush1.bf16.msra.mxu0 0
    %123 = vmatprep.subr.bf16.mxu0 0
    %124 = vmatpush1.bf16.msra.mxu0 0
    %125 = vmatprep.subr.bf16.mxu0 0
    %126 = vmatpush1.bf16.msra.mxu0 0
    %127 = vmatprep.subr.bf16.mxu0 0
    %128 = vmatpush1.bf16.msra.mxu0 0
    %129 = vmatprep.subr.bf16.mxu0 0
    %130 = vmatpush1.bf16.msra.mxu0 0
    %131 = vmatprep.subr.bf16.mxu0 0
    %132 = vmatpush1.bf16.msra.mxu0 0
    %133 = vmatprep.subr.bf16.mxu0 0
    %134 = vmatpush1.bf16.msra.mxu0 0
    %135 = vmatprep.subr.bf16.mxu0 0
    %136 = vmatpush1.bf16.msra.mxu0 0
    %137 = vmatprep.subr.bf16.mxu0 0
    %138 = vmatpush1.bf16.msra.mxu0 0
    %139 = vmatprep.subr.bf16.mxu0 0
    %140 = vmatpush1.bf16.msra.mxu0 0
    %141 = vmatprep.subr.bf16.mxu0 0
    %142 = vmatpush1.bf16.msra.mxu0 0
    %143 = vmatprep.subr.bf16.mxu0 0
    %144 = vmatpush1.bf16.msra.mxu0 0
    %145 = vmatprep.subr.bf16.mxu0 0
    %146 = vmatpush1.bf16.msra.mxu0 0
    %147 = vmatprep.subr.bf16.mxu0 0
    %148 = vmatpush1.bf16.msra.mxu0 0
    %149 = vmatprep.mubr.bf16.mxu0 0
    %150 = vmatmul.mubr.bf16.gmra.mrb[0].mxu0 %v115
    %v151 = vpop.f32.mrb[0].mxu0
    %v152 = vadd.f32 0.0, %v151
    %v153 = vpop.f32.mrb[0].mxu0
    %v154 = vpop.f32.mrb[0].mxu0
    %v155 = vadd.f32 0.0, %v154
    %v156 = vpop.f32.mrb[0].mxu0
    %157 = vdwg.mxu0
    %v158 = vmax.f32 %v152, -30.0
    %v159 = vmax.f32 %v155, -30.0
    %v160 = vmin.f32 %v158, 30.0
    %v161 = vmin.f32 %v159, 30.0
    %s162 = sadd.s32 0, 0
    %s163 = smul.u32 %s162, 16
    %v164 = vlaneseq
    %v165 = vshrl.u32 %v164, 7
    %v166 = vadd.s32 %v165, 8
    %v167 = vstv %s163
    %v168 = vadd.s32 %v167, %v165
    %v169 = vadd.s32 %v167, %v166
    %v170 = vld [vmem:[%s88] sm:$0xff]
    %v171 = vld [vmem:[%s88 + $0x8] sm:$0xff]
    %s172 = smul.u32 0, 128
    %v173 = vstv %s172
    %v174 = vsub.s32 %v170, %v173
    %v175 = vsub.s32 %v171, %v173
    %vm176 = vcmp.lt.s32.totalorder %v168, 16
    %vm177 = vcmp.lt.s32.totalorder %v169, 16
    %v178 = vsel %vm176, %v174, 4294967295
    %v179 = vsel %vm177, %v175, 4294967295
    %v180 = vlaneseq
    %v181 = vand.u32 %v180, 127
    %182 = vset.pattern.permute.xlu0 0
    %183 = vperm.xlu0 %182, %v178
    %v184 = vpop.permute.xlu0 %183
    %185 = vset.pattern.permute.xlu0 0
    %186 = vperm.xlu0 %185, %v179
    %v187 = vpop.permute.xlu0 %186
    %vm188 = vcmp.eq.s32.totalorder %v181, %v184
    %vm189 = vcmp.eq.s32.totalorder %v181, %v187
    %v190 = vsel %vm188, %v160, 0.0
    %v191 = vsel %vm189, %v161, 0.0
    %v192 = vadd.f32 %v190, %v191
    %p193 = scmp.eq.s32.totalorder 0, 0
    // Predicated region
    $region18: #{tpu_custom_call.1} parent=1 // pred_check
      %p194 = pneg %p193
    $region19: #{tpu_custom_call.1} parent=1 // pred_check_branch
      %196 = sbr.rel (%p194) target = $region21
    $region20: #{tpu_custom_call.1} parent=1 // pred_region
      %197 = vst [vmem:[#allocation5] sm:$0xff] 0.0
    $region21: #{tpu_custom_call.1} parent=1 // pred_fallthru
      _
    %v198 = vld [vmem:[#allocation5] sm:$0xff]
    %v199 = vadd.f32 %v198, %v192
    %200 = vst [vmem:[#allocation5] sm:$0xff] %v199
    // Predicated region
    $region22: #{tpu_custom_call.1} parent=1 // pred_check
      _
    $region23: #{tpu_custom_call.1} parent=1 // pred_check_branch
      %202 = sbr.rel (0) target = $region25
    $region24: #{tpu_custom_call.1} parent=1 // pred_region
      %s204 = ssub.s32 128, 128
      %205 = vsyncadd [#allocation4], %s204
      %s207 = sshll.u32 [#allocation5], 4
      %s208 = int_to_ptr.vmem [resolvable:$true] %s207
      %210 = dma.vmem_to_hbm [thread:$0]  %s208, 128, %s3, [#allocation4]
    $region25: #{tpu_custom_call.1} parent=1 // pred_fallthru
      _
    // Predicated region
    $region26: #{tpu_custom_call.1} parent=1 // pred_check
      _
    $region27: #{tpu_custom_call.1} parent=1 // pred_check_branch
      %212 = sbr.rel (0) target = $region29
    $region28: #{tpu_custom_call.1} parent=1 // pred_region
      %213 = dma.done [#allocation4], 128
    $region29: #{tpu_custom_call.1} parent=1 // pred_fallthru
      _
    %214 = vsyncpa [#allocation3], 1
    %215 = vsyncpa [#allocation4], 1

</llo_original>
